<compile_context>
chip_gen: v7x
topology: tpu7x:2x2x1
jax: 0.10.0
libtpu: 0.0.40
codegen_flags: <defaults>
</compile_context>

<pallas_src>
import jax
import jax.numpy as jnp
import numpy as np
from jax.experimental import pallas as pl
from jax.experimental.pallas import tpu as pltpu

BN_EPS = 1e-5      # torch.nn.BatchNorm1d default eps
NORM_EPS = 1e-12   # torch.nn.functional.normalize default eps
LANE = 128         # TPU lane width


def _round_up(x, m):
    return ((x + m - 1) // m) * m


def _tpu_generation_info():
    """Best-effort query of per-core VMEM capacity and TensorCore count."""
    vmem_cap = 64 * 1024 * 1024          # conservative default (v7x-sized)
    try:
        vmem_cap = int(pltpu.get_tpu_info().vmem_capacity_bytes)
    except Exception:
        pass
    n_tc = 1
    try:
        kind = jax.devices()[0].device_kind.lower()
        # megacore / dual-TensorCore devices
        if any(tag in kind for tag in ("v4", "v5p", "v7")):
            n_tc = 2
    except Exception:
        pass
    return vmem_cap, n_tc


def _choose_batch_tiling(B, *, d_in_pad, out_pads, max_d_pad, param_bytes,
                         vmem_cap, n_tc, max_tile_cap=512):
    """Pick (batch tile, padded batch).

    Single-TC chips (v5e/v6e) and small batches: one grid step with the biggest
    tile that fits VMEM (the grid is a purely serial loop there).  Dual-TC
    chips: at least 2 grid steps so dimension_semantics=("parallel",) shards
    the batch across both cores.
    """
    B8 = _round_up(max(int(B), 1), 8)
    # Bytes per batch row resident in VMEM: double-buffered x/out tiles (f32)
    # plus a generous allowance for live f32 intermediates.
    per_row = 4 * (2 * d_in_pad + 2 * sum(out_pads) + 6 * max_d_pad)
    budget = int(0.6 * vmem_cap) - 2 * param_bytes
    cap = max(8, (budget // max(per_row, 1)) // 8 * 8)
    max_tile = max(8, min(max_tile_cap, cap))

    if n_tc <= 1 or B8 <= 256:
        tb = min(B8, max_tile)
    else:
        n_steps = max(2, -(-B8 // max_tile))
        tb = -(-B8 // n_steps)
        # MXU-pass align each step's row count, but only if it does not inflate
        # padding by more than ~12%.
        chosen = None
        for align in (256, 128, 8):
            cand = _round_up(tb, align)
            if cand <= max_tile and n_steps * cand <= B8 + max(B8 // 8, 8):
                chosen = cand
                break
        tb = chosen if chosen is not None else min(_round_up(tb, 8), max_tile)

    n_steps = -(-B8 // tb)
    return tb, n_steps * tb


def _fold_and_pad(raw_layers, weight_dtype=jnp.bfloat16):
    """Exact eval-mode BN fold into the preceding Linear + zero-pad to 128 lanes.

    raw_layers: list of dicts with w (d_in, d_out), b/gamma/beta/mean/var (1, d_out).
    Returns list of (w_padded, b_padded); weights stored in `weight_dtype`
    (bf16 halves DMA bytes + resident VMEM), biases kept f32 (negligible size).
    """
    out = []
    for p in raw_layers:
        scale = p["gamma"] * jax.lax.rsqrt(p["var"] + BN_EPS)     # (1, d_out)
        w = p["w"] * scale                                        # (d_in, d_out)
        b = (p["b"] - p["mean"]) * scale + p["beta"]              # (1, d_out)
        d_in, d_out = w.shape
        d_in_p, d_out_p = _round_up(d_in, LANE), _round_up(d_out, LANE)
        w = jnp.pad(w, ((0, d_in_p - d_in), (0, d_out_p - d_out))).astype(weight_dtype)
        b = jnp.pad(b, ((0, 0), (0, d_out_p - d_out))).astype(jnp.float32)
        out.append((w, b))
    return out


# --------------------------------------------------------------------------
# Pallas kernel: fused (Linear[BN-folded] -> ReLU)* -> Linear -> L2 norm,
# evaluated for one or more branches sharing the same input tile.  For the
# dual (2-branch) case the first Linear of both branches is fused into one
# lane-full matmul.
# --------------------------------------------------------------------------
def _make_mlp_kernel(n_layers, n_branches, normalize_last, fused_first, split_widths):
    n_param_refs = (2 + 2 * (n_layers - 1) * n_branches) if fused_first \
        else 2 * n_layers * n_branches

    def kernel(*refs):
        x_ref = refs[0]
        params = refs[1:1 + n_param_refs]
        out_refs = refs[1 + n_param_refs:]

        # Load the batch tile once; reused by every branch.
        x = x_ref[...]

        if fused_first:
            w0_ref, b0_ref = params[0], params[1]
            # Single lane-full MXU pass producing layer-0 activations for ALL
            # branches (they share the same input at layer 0).
            h0 = jnp.dot(x.astype(w0_ref.dtype), w0_ref[...],
                         preferred_element_type=jnp.float32) + b0_ref[...]
            if n_layers > 1:
                h0 = jnp.maximum(h0, 0.0)
            rest = params[2:]
            per_branch = 2 * (n_layers - 1)
        else:
            rest = params
            per_branch = 2 * n_layers

        col = 0
        for br in range(n_branches):
            if fused_first:
                # 128-aligned static slice -> stays lane-dense.
                h = h0[:, col:col + split_widths[br]]
                col += split_widths[br]
                start = 1
            else:
                h = x
                start = 0
            base = per_branch * br
            for i in range(start, n_layers):
                w_ref = rest[base + 2 * (i - start)]
                b_ref = rest[base + 2 * (i - start) + 1]
                # Linear with eval-mode BatchNorm folded into (w, b); bf16 MXU
                # pass with f32 accumulation.
                h = jnp.dot(h.astype(w_ref.dtype), w_ref[...],
                            preferred_element_type=jnp.float32) + b_ref[...]
                if i < n_layers - 1:
                    h = jnp.maximum(h, 0.0)
            if normalize_last:
                # F.normalize: h / max(||h||, eps) == h * rsqrt(max(||h||^2, eps^2))
                ssq = jnp.sum(h * h, axis=-1, keepdims=True)
                h = h * jax.lax.rsqrt(jnp.maximum(ssq, NORM_EPS * NORM_EPS))
            out_refs[br][...] = h.astype(out_refs[br].dtype)

    return kernel


def mlp_forward_pallas(x, branches, out_dims, *, normalize_last=True,
                       fuse_first_layer=True):
    """Fused forward over one or more MLP branches sharing the same input.

    x: (B, d_in) float32 (unpadded)
    branches: per-branch list of (w_padded_bf16, b_padded_f32) folded layer params.
    out_dims: true (unpadded) output width per branch.
    Returns list of (B, out_dims[k]) float32 arrays.
    """
    B, d_in = x.shape
    n_branches = len(branches)
    n_layers = len(branches[0])
    d_in_pad = int(branches[0][0][0].shape[0])

    fused_first = (bool(fuse_first_layer) and n_branches > 1
                   and all(int(lyrs[0][0].shape[0]) == d_in_pad for lyrs in branches))

    flat_params = []
    split_widths = ()
    if fused_first:
        # Concatenate the branches' layer-0 weights along d_out (pure repack,
        # no extra FLOPs) -> one lane-full matmul instead of two half-full ones.
        w0 = jnp.concatenate([lyrs[0][0] for lyrs in branches], axis=1)
        b0 = jnp.concatenate([lyrs[0][1] for lyrs in branches], axis=1)
        split_widths = tuple(int(lyrs[0][0].shape[1]) for lyrs in branches)
        flat_params += [w0, b0]
        for lyrs in branches:
            for (w, b) in lyrs[1:]:
                flat_params += [w, b]
    else:
        for lyrs in branches:
            for (w, b) in lyrs:
                flat_params += [w, b]

    out_pads = [int(lyrs[-1][0].shape[1]) for lyrs in branches]
    max_d_pad = max([d_in_pad]
                    + [int(w.shape[1]) for lyrs in branches for (w, _) in lyrs]
                    + ([sum(split_widths)] if fused_first else []))
    param_bytes = sum(int(p.size) * p.dtype.itemsize for p in flat_params)

    vmem_cap, n_tc = _tpu_generation_info()
    tb, B_pad = _choose_batch_tiling(
        B, d_in_pad=d_in_pad, out_pads=out_pads, max_d_pad=max_d_pad,
        param_bytes=param_bytes, vmem_cap=vmem_cap, n_tc=n_tc)

    x_p = x.astype(jnp.float32)
    if (B_pad, d_in_pad) != (B, d_in):
        x_p = jnp.pad(x_p, ((0, B_pad - B), (0, d_in_pad - d_in)))

    kernel = _make_mlp_kernel(n_layers, n_branches, normalize_last,
                              fused_first, split_widths)

    out_shape = tuple(jax.ShapeDtypeStruct((B_pad, dp), jnp.float32) for dp in out_pads)
    out_specs = tuple(pl.BlockSpec((tb, dp), lambda i: (i, 0)) for dp in out_pads)

    # Scheduling hints for XLA.
    flops = 2 * B_pad * sum(int(p.shape[0]) * int(p.shape[1])
                            for p in flat_params if p.shape[0] > 1)
    bytes_accessed = int(4 * x_p.size + param_bytes + 4 * B_pad * sum(out_pads))
    transcendentals = B_pad * n_branches if normalize_last else 0

    # Explicit scoped-VMEM limit from the footprint (params counted as if
    # double-buffered so the fallback path also fits), clamped under physical.
    act_bytes = 4 * tb * (2 * d_in_pad + 2 * sum(out_pads) + 6 * max_d_pad)
    vmem_limit = int(1.25 * (2 * param_bytes + act_bytes))
    vmem_limit = max(vmem_limit, 32 << 20)
    vmem_limit = min(vmem_limit, max(16 << 20, vmem_cap - (8 << 20)))

    def build(param_pipeline_mode):
        in_specs = [pl.BlockSpec((tb, d_in_pad), lambda i: (i, 0))]
        for p in flat_params:
            if param_pipeline_mode is None:
                in_specs.append(pl.BlockSpec(p.shape, lambda i: (0, 0)))
            else:
                # Constant index_map -> single-buffer the resident parameters.
                in_specs.append(pl.BlockSpec(p.shape, lambda i: (0, 0),
                                             pipeline_mode=param_pipeline_mode))
        return pl.pallas_call(
            kernel,
            out_shape=out_shape,
            grid_spec=pltpu.PrefetchScalarGridSpec(
                num_scalar_prefetch=0,
                grid=(B_pad // tb,),
                in_specs=in_specs,
                out_specs=out_specs,
            ),
            compiler_params=pltpu.CompilerParams(
                dimension_semantics=("parallel",),
                vmem_limit_bytes=int(vmem_limit),
            ),
            cost_estimate=pl.CostEstimate(
                flops=flops,
                transcendentals=transcendentals,
                bytes_accessed=bytes_accessed,
            ),
        )

    try:
        outs = build(pl.Buffered(1))(x_p, *flat_params)
    except Exception:
        # Fallback if this JAX build rejects single-buffered pipeline_mode on
        # the top-level pallas_call: double-buffered params are still correct,
        # they just use more VMEM.
        outs = build(None)(x_p, *flat_params)

    return [o[:B, :d] for o, d in zip(outs, out_dims)]


# --------------------------------------------------------------------------
# Model wrapper (parameter construction + branch dispatch, plain JAX glue)
# --------------------------------------------------------------------------
class ReactEmbedModelPallas:
    def __init__(self, p_dim, m_dim, n_layers, hidden_dim, dropout=0.0,
                 normalize_last=1, key=None):
        if n_layers < 1:
            raise ValueError("n_layers must be at least 1")
        self.p_dim, self.m_dim = p_dim, m_dim
        self.normalize_last = bool(normalize_last)
        # dropout is a no-op in eval mode (inference semantics)
        key = jax.random.PRNGKey(0) if key is None else key

        self.raw_layers = {}      # torch-style params (Linear + BN), for reference
        self.folded_layers = {}   # BN folded into (W', b'), bf16 weights, 128-lane padded
        self.out_dim = {}
        for src_dim, src in zip([p_dim, m_dim], ["P", "M"]):
            for dst_dim, dst in zip([p_dim, m_dim], ["P", "M"]):
                name = f"{src}-{dst}"
                dims = [src_dim] + [hidden_dim] * (n_layers - 1) + [dst_dim]
                raw = []
                for i in range(len(dims) - 1):
                    key, k_w, k_b, k_g, k_bt, k_m, k_v = jax.random.split(key, 7)
                    din, dout = dims[i], dims[i + 1]
                    raw.append(dict(
                        w=jax.random.normal(k_w, (din, dout), jnp.float32) * 0.1,
                        b=jax.random.normal(k_b, (1, dout), jnp.float32) * 0.1,
                        gamma=1.0 + 0.1 * jax.random.normal(k_g, (1, dout), jnp.float32),
                        beta=0.1 * jax.random.normal(k_bt, (1, dout), jnp.float32),
                        mean=0.1 * jax.random.normal(k_m, (1, dout), jnp.float32),
                        var=jax.random.uniform(k_v, (1, dout), jnp.float32, 0.5, 1.5),
                    ))
                self.raw_layers[name] = raw
                self.folded_layers[name] = _fold_and_pad(raw)
                self.out_dim[name] = dst_dim

    def forward(self, x, type_):
        (y,) = mlp_forward_pallas(
            x, [self.folded_layers[type_]], [self.out_dim[type_]],
            normalize_last=self.normalize_last)
        return y

    def dual_forward(self, x, type_1):
        names = ("P-P", "P-M") if type_1 == "P" else ("M-P", "M-M")
        # Single fused pallas_call: x is loaded once, both branches' layer-0
        # Linears run as one lane-full matmul, both MLPs finish in the same
        # kernel body, two lane-dense outputs are written.
        ys = mlp_forward_pallas(
            x, [self.folded_layers[n] for n in names],
            [self.out_dim[n] for n in names],
            normalize_last=self.normalize_last,
            fuse_first_layer=True)
        return jnp.concatenate(ys, axis=-1)

    # ---------------- pure-JAX references for verification ----------------
    def forward_ref(self, x, type_):
        """Torch-faithful f32 reference: Linear -> BatchNorm(eval) -> ReLU."""
        h = x.astype(jnp.float32)
        layers = self.raw_layers[type_]
        for i, p in enumerate(layers):
            h = h @ p["w"] + p["b"]
            h = (h - p["mean"]) * jax.lax.rsqrt(p["var"] + BN_EPS) * p["gamma"] + p["beta"]
            if i < len(layers) - 1:
                h = jnp.maximum(h, 0.0)
        if self.normalize_last:
            n = jnp.sqrt(jnp.sum(h * h, axis=-1, keepdims=True))
            h = h / jnp.maximum(n, NORM_EPS)
        return h

    def forward_folded_ref(self, x, type_):
        """Reference using exactly the folded/padded bf16 params the kernel sees."""
        layers = self.folded_layers[type_]
        d_in_pad = layers[0][0].shape[0]
        h = jnp.pad(x.astype(jnp.float32), ((0, 0), (0, d_in_pad - x.shape[1])))
        for i, (w, b) in enumerate(layers):
            h = jnp.dot(h.astype(w.dtype), w, preferred_element_type=jnp.float32) + b
            if i < len(layers) - 1:
                h = jnp.maximum(h, 0.0)
        if self.normalize_last:
            ssq = jnp.sum(h * h, axis=-1, keepdims=True)
            h = h * jax.lax.rsqrt(jnp.maximum(ssq, NORM_EPS * NORM_EPS))
        return h[:, :self.out_dim[type_]]

    def dual_forward_ref(self, x, type_1):
        names = ("P-P", "P-M") if type_1 == "P" else ("M-P", "M-M")
        return jnp.concatenate([self.forward_ref(x, n) for n in names], axis=-1)

    def dual_forward_folded_ref(self, x, type_1):
        names = ("P-P", "P-M") if type_1 == "P" else ("M-P", "M-M")
        return jnp.concatenate([self.forward_folded_ref(x, n) for n in names], axis=-1)


if __name__ == "__main__":
    # small config: p_dim=16, m_dim=32, n_layers=3, hidden_dim=32, batch=16
    P_DIM, M_DIM, N_LAYERS, HIDDEN, BATCH = 16, 32, 3, 32, 16

    key = jax.random.PRNGKey(0)
    k_model, k_x = jax.random.split(key)
    model = ReactEmbedModelPallas(P_DIM, M_DIM, N_LAYERS, HIDDEN,
                                  dropout=0.1, normalize_last=1, key=k_model)

    x = jax.random.normal(k_x, (BATCH, P_DIM), jnp.float32)

    # single-branch forward
    y_pm = model.forward(x, "P-M")
    jax.block_until_ready(y_pm)
    assert y_pm.shape == (BATCH, M_DIM)

    # tight check: kernel vs plain-JAX on the exact same folded/padded bf16 params
    np.testing.assert_allclose(np.asarray(y_pm),
                               np.asarray(model.forward_folded_ref(x, "P-M")),
                               rtol=5e-4, atol=5e-4)
    # semantic check: kernel vs torch-faithful f32 (unfolded Linear->BN->ReLU)
    # reference; tolerance accommodates bf16 parameter storage + bf16 MXU passes.
    np.testing.assert_allclose(np.asarray(y_pm),
                               np.asarray(model.forward_ref(x, "P-M")),
                               rtol=3e-2, atol=3e-2)

    # fused dual forward (both branches + fused layer-0 in one pallas_call)
    y_dual = model.dual_forward(x, "P")
    jax.block_until_ready(y_dual)
    assert y_dual.shape == (BATCH, P_DIM + M_DIM)
    np.testing.assert_allclose(np.asarray(y_dual),
                               np.asarray(model.dual_forward_folded_ref(x, "P")),
                               rtol=5e-4, atol=5e-4)
    np.testing.assert_allclose(np.asarray(y_dual),
                               np.asarray(model.dual_forward_ref(x, "P")),
                               rtol=3e-2, atol=3e-2)

    print("KERNEL_OK")
</pallas_src>

<mosaic_0001>
module attributes {stable_mosaic.version = 11 : i64} {
  func.func @kernel(%arg0: i32, %arg1: memref<16x128xf32, #tpu.memory_space<vmem>>, %arg2: memref<128x128xbf16, #tpu.memory_space<vmem>>, %arg3: memref<1x128xf32, #tpu.memory_space<vmem>>, %arg4: memref<128x128xbf16, #tpu.memory_space<vmem>>, %arg5: memref<1x128xf32, #tpu.memory_space<vmem>>, %arg6: memref<128x128xbf16, #tpu.memory_space<vmem>>, %arg7: memref<1x128xf32, #tpu.memory_space<vmem>>, %arg8: memref<16x128xf32, #tpu.memory_space<vmem>>) attributes {dimension_semantics = [#tpu.dimension_semantics<parallel>], iteration_bounds = array<i64: 1>, scalar_prefetch = 0 : i64, scratch_operands = 0 : i64, tpu.core_type = #tpu.core_type<tc>, window_params = [{transform_indices = @transform_0, window_bounds = array<i64: 16, 128>}, {pipeline_mode = #tpu.pipeline_mode<synchronous>, transform_indices = @transform_1, window_bounds = array<i64: 128, 128>}, {pipeline_mode = #tpu.pipeline_mode<synchronous>, transform_indices = @transform_2, window_bounds = array<i64: 1, 128>}, {pipeline_mode = #tpu.pipeline_mode<synchronous>, transform_indices = @transform_3, window_bounds = array<i64: 128, 128>}, {pipeline_mode = #tpu.pipeline_mode<synchronous>, transform_indices = @transform_4, window_bounds = array<i64: 1, 128>}, {pipeline_mode = #tpu.pipeline_mode<synchronous>, transform_indices = @transform_5, window_bounds = array<i64: 128, 128>}, {pipeline_mode = #tpu.pipeline_mode<synchronous>, transform_indices = @transform_6, window_bounds = array<i64: 1, 128>}, {transform_indices = @transform_7, window_bounds = array<i64: 16, 128>}]} {
    %c0 = arith.constant 0 : index
    %c0_0 = arith.constant 0 : index
    %0 = vector.load %arg1[%c0, %c0_0] : memref<16x128xf32, #tpu.memory_space<vmem>>, vector<16x128xf32>
    %1 = arith.truncf %0 : vector<16x128xf32> to vector<16x128xbf16>
    %c0_1 = arith.constant 0 : index
    %c0_2 = arith.constant 0 : index
    %2 = vector.load %arg2[%c0_1, %c0_2] : memref<128x128xbf16, #tpu.memory_space<vmem>>, vector<128x128xbf16>
    %cst = arith.constant dense<0.000000e+00> : vector<16x128xf32>
    %3 = tpu.matmul %1, %2, %cst {dimension_numbers = #tpu.dot_dimension_numbers<[1], [0], [0], [1], [0, 0, 1, 1], [], []>} : vector<16x128xbf16>, vector<128x128xbf16>, vector<16x128xf32> -> vector<16x128xf32>
    %c0_3 = arith.constant 0 : index
    %c0_4 = arith.constant 0 : index
    %4 = vector.load %arg3[%c0_3, %c0_4] : memref<1x128xf32, #tpu.memory_space<vmem>>, vector<1x128xf32>
    %5 = vector.broadcast %4 : vector<1x128xf32> to vector<16x128xf32>
    %6 = arith.addf %3, %5 : vector<16x128xf32>
    %cst_5 = arith.constant 0.000000e+00 : f32
    %7 = vector.broadcast %cst_5 : f32 to vector<16x128xf32>
    %8 = arith.maximumf %6, %7 : vector<16x128xf32>
    %9 = arith.truncf %8 : vector<16x128xf32> to vector<16x128xbf16>
    %c0_6 = arith.constant 0 : index
    %c0_7 = arith.constant 0 : index
    %10 = vector.load %arg4[%c0_6, %c0_7] : memref<128x128xbf16, #tpu.memory_space<vmem>>, vector<128x128xbf16>
    %cst_8 = arith.constant dense<0.000000e+00> : vector<16x128xf32>
    %11 = tpu.matmul %9, %10, %cst_8 {dimension_numbers = #tpu.dot_dimension_numbers<[1], [0], [0], [1], [0, 0, 1, 1], [], []>} : vector<16x128xbf16>, vector<128x128xbf16>, vector<16x128xf32> -> vector<16x128xf32>
    %c0_9 = arith.constant 0 : index
    %c0_10 = arith.constant 0 : index
    %12 = vector.load %arg5[%c0_9, %c0_10] : memref<1x128xf32, #tpu.memory_space<vmem>>, vector<1x128xf32>
    %13 = vector.broadcast %12 : vector<1x128xf32> to vector<16x128xf32>
    %14 = arith.addf %11, %13 : vector<16x128xf32>
    %cst_11 = arith.constant 0.000000e+00 : f32
    %15 = vector.broadcast %cst_11 : f32 to vector<16x128xf32>
    %16 = arith.maximumf %14, %15 : vector<16x128xf32>
    %17 = arith.truncf %16 : vector<16x128xf32> to vector<16x128xbf16>
    %c0_12 = arith.constant 0 : index
    %c0_13 = arith.constant 0 : index
    %18 = vector.load %arg6[%c0_12, %c0_13] : memref<128x128xbf16, #tpu.memory_space<vmem>>, vector<128x128xbf16>
    %cst_14 = arith.constant dense<0.000000e+00> : vector<16x128xf32>
    %19 = tpu.matmul %17, %18, %cst_14 {dimension_numbers = #tpu.dot_dimension_numbers<[1], [0], [0], [1], [0, 0, 1, 1], [], []>} : vector<16x128xbf16>, vector<128x128xbf16>, vector<16x128xf32> -> vector<16x128xf32>
    %c0_15 = arith.constant 0 : index
    %c0_16 = arith.constant 0 : index
    %20 = vector.load %arg7[%c0_15, %c0_16] : memref<1x128xf32, #tpu.memory_space<vmem>>, vector<1x128xf32>
    %21 = vector.broadcast %20 : vector<1x128xf32> to vector<16x128xf32>
    %22 = arith.addf %19, %21 : vector<16x128xf32>
    %23 = arith.mulf %22, %22 : vector<16x128xf32>
    %cst_17 = arith.constant dense<0.000000e+00> : vector<16xf32>
    %24 = vector.multi_reduction <add>, %23, %cst_17 [1] : vector<16x128xf32> to vector<16xf32>
    %25 = vector.shape_cast %24 : vector<16xf32> to vector<16x1xf32>
    %cst_18 = arith.constant 1.000000e-24 : f32
    %26 = vector.broadcast %cst_18 : f32 to vector<16x1xf32>
    %27 = arith.maximumf %25, %26 : vector<16x1xf32>
    %28 = math.rsqrt %27 : vector<16x1xf32>
    %29 = vector.broadcast %28 : vector<16x1xf32> to vector<16x128xf32>
    %30 = arith.mulf %22, %29 : vector<16x128xf32>
    %c0_19 = arith.constant 0 : index
    %c0_20 = arith.constant 0 : index
    %31 = vector.load %arg8[%c0_19, %c0_20] : memref<16x128xf32, #tpu.memory_space<vmem>>, vector<16x128xf32>
    tpu.vector_store %arg8[%c0_19, %c0_20], %30 {strides = array<i32>} : memref<16x128xf32, #tpu.memory_space<vmem>>, vector<16x128xf32>,
    return
  }
  func.func @transform_0(%arg0: i32) -> (i32, i32) {
    %c0_i32 = arith.constant 0 : i32
    %c0_i32_0 = arith.constant 0 : i32
    return %arg0, %c0_i32 : i32, i32
  }
  func.func @transform_1(%arg0: i32) -> (i32, i32) {
    %c0_i32 = arith.constant 0 : i32
    %c0_i32_0 = arith.constant 0 : i32
    %c0_i32_1 = arith.constant 0 : i32
    return %c0_i32, %c0_i32_0 : i32, i32
  }
  func.func @transform_2(%arg0: i32) -> (i32, i32) {
    %c0_i32 = arith.constant 0 : i32
    %c0_i32_0 = arith.constant 0 : i32
    %c0_i32_1 = arith.constant 0 : i32
    return %c0_i32, %c0_i32_0 : i32, i32
  }
  func.func @transform_3(%arg0: i32) -> (i32, i32) {
    %c0_i32 = arith.constant 0 : i32
    %c0_i32_0 = arith.constant 0 : i32
    %c0_i32_1 = arith.constant 0 : i32
    return %c0_i32, %c0_i32_0 : i32, i32
  }
  func.func @transform_4(%arg0: i32) -> (i32, i32) {
    %c0_i32 = arith.constant 0 : i32
    %c0_i32_0 = arith.constant 0 : i32
    %c0_i32_1 = arith.constant 0 : i32
    return %c0_i32, %c0_i32_0 : i32, i32
  }
  func.func @transform_5(%arg0: i32) -> (i32, i32) {
    %c0_i32 = arith.constant 0 : i32
    %c0_i32_0 = arith.constant 0 : i32
    %c0_i32_1 = arith.constant 0 : i32
    return %c0_i32, %c0_i32_0 : i32, i32
  }
  func.func @transform_6(%arg0: i32) -> (i32, i32) {
    %c0_i32 = arith.constant 0 : i32
    %c0_i32_0 = arith.constant 0 : i32
    %c0_i32_1 = arith.constant 0 : i32
    return %c0_i32, %c0_i32_0 : i32, i32
  }
  func.func @transform_7(%arg0: i32) -> (i32, i32) {
    %c0_i32 = arith.constant 0 : i32
    %c0_i32_0 = arith.constant 0 : i32
    return %arg0, %c0_i32 : i32, i32
  }
}

module attributes {stable_mosaic.version = 11 : i64} {
  func.func @kernel(%arg0: i32, %arg1: memref<16x128xf32, #tpu.memory_space<vmem>>, %arg2: memref<128x128xbf16, #tpu.memory_space<vmem>>, %arg3: memref<1x128xf32, #tpu.memory_space<vmem>>, %arg4: memref<128x128xbf16, #tpu.memory_space<vmem>>, %arg5: memref<1x128xf32, #tpu.memory_space<vmem>>, %arg6: memref<128x128xbf16, #tpu.memory_space<vmem>>, %arg7: memref<1x128xf32, #tpu.memory_space<vmem>>, %arg8: memref<16x128xf32, #tpu.memory_space<vmem>>) attributes {dimension_semantics = [#tpu.dimension_semantics<parallel>], iteration_bounds = array<i64: 1>, scalar_prefetch = 0 : i64, scratch_operands = 0 : i64, tpu.core_type = #tpu.core_type<tc>, window_params = [{transform_indices = @transform_0, window_bounds = array<i64: 16, 128>}, {pipeline_mode = #tpu.pipeline_mode<synchronous>, transform_indices = @transform_1, window_bounds = array<i64: 128, 128>}, {pipeline_mode = #tpu.pipeline_mode<synchronous>, transform_indices = @transform_2, window_bounds = array<i64: 1, 128>}, {pipeline_mode = #tpu.pipeline_mode<synchronous>, transform_indices = @transform_3, window_bounds = array<i64: 128, 128>}, {pipeline_mode = #tpu.pipeline_mode<synchronous>, transform_indices = @transform_4, window_bounds = array<i64: 1, 128>}, {pipeline_mode = #tpu.pipeline_mode<synchronous>, transform_indices = @transform_5, window_bounds = array<i64: 128, 128>}, {pipeline_mode = #tpu.pipeline_mode<synchronous>, transform_indices = @transform_6, window_bounds = array<i64: 1, 128>}, {transform_indices = @transform_7, window_bounds = array<i64: 16, 128>}]} {
    %c0 = arith.constant 0 : index
    %c0_0 = arith.constant 0 : index
    %0 = vector.load %arg1[%c0, %c0_0] : memref<16x128xf32, #tpu.memory_space<vmem>>, vector<16x128xf32>
    %1 = arith.truncf %0 : vector<16x128xf32> to vector<16x128xbf16>
    %c0_1 = arith.constant 0 : index
    %c0_2 = arith.constant 0 : index
    %2 = vector.load %arg2[%c0_1, %c0_2] : memref<128x128xbf16, #tpu.memory_space<vmem>>, vector<128x128xbf16>
    %cst = arith.constant dense<0.000000e+00> : vector<16x128xf32>
    %3 = tpu.matmul %1, %2, %cst {dimension_numbers = #tpu.dot_dimension_numbers<[1], [0], [0], [1], [0, 0, 1, 1], [], []>} : vector<16x128xbf16>, vector<128x128xbf16>, vector<16x128xf32> -> vector<16x128xf32>
    %c0_3 = arith.constant 0 : index
    %c0_4 = arith.constant 0 : index
    %4 = vector.load %arg3[%c0_3, %c0_4] : memref<1x128xf32, #tpu.memory_space<vmem>>, vector<1x128xf32>
    %5 = vector.broadcast %4 : vector<1x128xf32> to vector<16x128xf32>
    %6 = arith.addf %3, %5 : vector<16x128xf32>
    %cst_5 = arith.constant 0.000000e+00 : f32
    %7 = vector.broadcast %cst_5 : f32 to vector<16x128xf32>
    %8 = arith.maximumf %6, %7 : vector<16x128xf32>
    %9 = arith.truncf %8 : vector<16x128xf32> to vector<16x128xbf16>
    %c0_6 = arith.constant 0 : index
    %c0_7 = arith.constant 0 : index
    %10 = vector.load %arg4[%c0_6, %c0_7] : memref<128x128xbf16, #tpu.memory_space<vmem>>, vector<128x128xbf16>
    %cst_8 = arith.constant dense<0.000000e+00> : vector<16x128xf32>
    %11 = tpu.matmul %9, %10, %cst_8 {dimension_numbers = #tpu.dot_dimension_numbers<[1], [0], [0], [1], [0, 0, 1, 1], [], []>} : vector<16x128xbf16>, vector<128x128xbf16>, vector<16x128xf32> -> vector<16x128xf32>
    %c0_9 = arith.constant 0 : index
    %c0_10 = arith.constant 0 : index
    %12 = vector.load %arg5[%c0_9, %c0_10] : memref<1x128xf32, #tpu.memory_space<vmem>>, vector<1x128xf32>
    %13 = vector.broadcast %12 : vector<1x128xf32> to vector<16x128xf32>
    %14 = arith.addf %11, %13 : vector<16x128xf32>
    %cst_11 = arith.constant 0.000000e+00 : f32
    %15 = vector.broadcast %cst_11 : f32 to vector<16x128xf32>
    %16 = arith.maximumf %14, %15 : vector<16x128xf32>
    %17 = arith.truncf %16 : vector<16x128xf32> to vector<16x128xbf16>
    %c0_12 = arith.constant 0 : index
    %c0_13 = arith.constant 0 : index
    %18 = vector.load %arg6[%c0_12, %c0_13] : memref<128x128xbf16, #tpu.memory_space<vmem>>, vector<128x128xbf16>
    %cst_14 = arith.constant dense<0.000000e+00> : vector<16x128xf32>
    %19 = tpu.matmul %17, %18, %cst_14 {dimension_numbers = #tpu.dot_dimension_numbers<[1], [0], [0], [1], [0, 0, 1, 1], [], []>} : vector<16x128xbf16>, vector<128x128xbf16>, vector<16x128xf32> -> vector<16x128xf32>
    %c0_15 = arith.constant 0 : index
    %c0_16 = arith.constant 0 : index
    %20 = vector.load %arg7[%c0_15, %c0_16] : memref<1x128xf32, #tpu.memory_space<vmem>>, vector<1x128xf32>
    %21 = vector.broadcast %20 : vector<1x128xf32> to vector<16x128xf32>
    %22 = arith.addf %19, %21 : vector<16x128xf32>
    %23 = arith.mulf %22, %22 : vector<16x128xf32>
    %cst_17 = arith.constant dense<0.000000e+00> : vector<16xf32>
    %24 = vector.multi_reduction <add>, %23, %cst_17 [1] : vector<16x128xf32> to vector<16xf32>
    %25 = vector.shape_cast %24 : vector<16xf32> to vector<16x1xf32>
    %cst_18 = arith.constant 1.000000e-24 : f32
    %26 = vector.broadcast %cst_18 : f32 to vector<16x1xf32>
    %27 = arith.maximumf %25, %26 : vector<16x1xf32>
    %28 = math.rsqrt %27 : vector<16x1xf32>
    %29 = vector.broadcast %28 : vector<16x1xf32> to vector<16x128xf32>
    %30 = arith.mulf %22, %29 : vector<16x128xf32>
    %c0_19 = arith.constant 0 : index
    %c0_20 = arith.constant 0 : index
    %31 = vector.load %arg8[%c0_19, %c0_20] : memref<16x128xf32, #tpu.memory_space<vmem>>, vector<16x128xf32>
    tpu.vector_store %arg8[%c0_19, %c0_20], %30 {strides = array<i32>} : memref<16x128xf32, #tpu.memory_space<vmem>>, vector<16x128xf32>,
    return
  }
  func.func @transform_0(%arg0: i32) -> (i32, i32) {
    %c0_i32 = arith.constant 0 : i32
    %c0_i32_0 = arith.constant 0 : i32
    return %arg0, %c0_i32 : i32, i32
  }
  func.func @transform_1(%arg0: i32) -> (i32, i32) {
    %c0_i32 = arith.constant 0 : i32
    %c0_i32_0 = arith.constant 0 : i32
    %c0_i32_1 = arith.constant 0 : i32
    return %c0_i32, %c0_i32_0 : i32, i32
  }
  func.func @transform_2(%arg0: i32) -> (i32, i32) {
    %c0_i32 = arith.constant 0 : i32
    %c0_i32_0 = arith.constant 0 : i32
    %c0_i32_1 = arith.constant 0 : i32
    return %c0_i32, %c0_i32_0 : i32, i32
  }
  func.func @transform_3(%arg0: i32) -> (i32, i32) {
    %c0_i32 = arith.constant 0 : i32
    %c0_i32_0 = arith.constant 0 : i32
    %c0_i32_1 = arith.constant 0 : i32
    return %c0_i32, %c0_i32_0 : i32, i32
  }
  func.func @transform_4(%arg0: i32) -> (i32, i32) {
    %c0_i32 = arith.constant 0 : i32
    %c0_i32_0 = arith.constant 0 : i32
    %c0_i32_1 = arith.constant 0 : i32
    return %c0_i32, %c0_i32_0 : i32, i32
  }
  func.func @transform_5(%arg0: i32) -> (i32, i32) {
    %c0_i32 = arith.constant 0 : i32
    %c0_i32_0 = arith.constant 0 : i32
    %c0_i32_1 = arith.constant 0 : i32
    return %c0_i32, %c0_i32_0 : i32, i32
  }
  func.func @transform_6(%arg0: i32) -> (i32, i32) {
    %c0_i32 = arith.constant 0 : i32
    %c0_i32_0 = arith.constant 0 : i32
    %c0_i32_1 = arith.constant 0 : i32
    return %c0_i32, %c0_i32_0 : i32, i32
  }
  func.func @transform_7(%arg0: i32) -> (i32, i32) {
    %c0_i32 = arith.constant 0 : i32
    %c0_i32_0 = arith.constant 0 : i32
    return %arg0, %c0_i32 : i32, i32
  }
}

</mosaic_0001>

<llo_original>
// kernel: tpu_custom_call.1
$region0: #{tpu_custom_call.1}
  #allocation0 [shape = 'u32[]', space=smem, size = 0x4, offset = 0x4, fixed_abs, tag = 'smem constant byte address 0x4 - core index']
  #allocation1 [shape = 'u32[144,128]{1,0:T(1,128)}', space=vmem, size = 0x12000, scoped, tag = 'internal scratch']
  %s0 = inlined_call_operand.hbm [shape: f32[16,128], index: 0, kind: input, shape index: {}]
  %s1 = inlined_call_operand.hbm [shape: bf16[128,128], index: 1, kind: input, shape index: {}]
  %s2 = inlined_call_operand.vmem [shape: f32[1,128], index: 2, kind: input, shape index: {}]
  %s3 = inlined_call_operand.hbm [shape: bf16[128,128], index: 3, kind: input, shape index: {}]
  %s4 = inlined_call_operand.vmem [shape: f32[1,128], index: 4, kind: input, shape index: {}]
  %s5 = inlined_call_operand.hbm [shape: bf16[128,128], index: 5, kind: input, shape index: {}]
  %s6 = inlined_call_operand.vmem [shape: f32[1,128], index: 6, kind: input, shape index: {}]
  %s7 = inlined_call_operand.hbm [shape: f32[16,128], index: 7, kind: output, shape index: {}]
  %s8 = sld [smem:[#allocation0]]
  $region54: #{tpu_custom_call.1} parent=0
    _
  %s10 = ssub.s32 1, %s8
  %s11 = scalar_select 0, %s10, %s8
  $region1: #{tpu_custom_call.1} parent=0
    #allocation2 [shape = 'u8[8192]{0}', space=vmem, size = 0x2000, scoped, tag = 'input window, operand 0, single buffered']
    #allocation3 [shape = 's32[1]{0}', space=sflag, size = 0x4, scoped, tag = 'scoped memory for tpu_custom_call.1']
    #allocation4 [shape = 's32[1]{0}', space=sflag, size = 0x4, scoped, tag = 'scoped memory for tpu_custom_call.1']
    #allocation5 [shape = 'u8[32768]{0}', space=vmem, size = 0x8000, scoped, tag = 'input window, operand 1, single buffered']
    #allocation6 [shape = 's32[1]{0}', space=sflag, size = 0x4, scoped, tag = 'scoped memory for tpu_custom_call.1']
    #allocation7 [shape = 'u8[32768]{0}', space=vmem, size = 0x8000, scoped, tag = 'input window, operand 3, single buffered']
    #allocation8 [shape = 'u8[32768]{0}', space=vmem, size = 0x8000, scoped, tag = 'input window, operand 5, single buffered']
    #allocation9 [shape = 's32[1]{0}', space=sflag, size = 0x4, scoped, tag = 'scoped memory for tpu_custom_call.1']
    #allocation10 [shape = 'u8[8192]{0}', space=vmem, size = 0x2000, scoped, tag = 'output window, operand 0, single buffered']
    %12 = vsyncpa [#allocation3], 0
    %13 = vsyncpa [#allocation6], 0
    %14 = vsyncpa [#allocation9], 0
    %15 = vsyncpa [#allocation4], 0
    // Predicated region
    $region2: #{tpu_custom_call.1} parent=1 // pred_check
      _
    $region3: #{tpu_custom_call.1} parent=1 // pred_check_branch
      %17 = sbr.rel (0) target = $region5
    $region4: #{tpu_custom_call.1} parent=1 // pred_region
      %s19 = ssub.s32 256, 256
      %20 = vsyncadd [#allocation3], %s19
      %s21 = sshll.u32 [#allocation2], 4
      %s22 = int_to_ptr.vmem [resolvable:$true] %s21
      %27 = dma.hbm_to_vmem [thread:$0]  %s0, 256, %s22, [#allocation3], 128, 128, 8
    $region5: #{tpu_custom_call.1} parent=1 // pred_fallthru
      _
    // Predicated region
    $region6: #{tpu_custom_call.1} parent=1 // pred_check
      _
    $region7: #{tpu_custom_call.1} parent=1 // pred_check_branch
      %29 = sbr.rel (0) target = $region9
    $region8: #{tpu_custom_call.1} parent=1 // pred_region
      %s31 = ssub.s32 1024, 1024
      %32 = vsyncadd [#allocation6], %s31
      %s33 = sshll.u32 [#allocation5], 4
      %s34 = int_to_ptr.vmem [resolvable:$true] %s33
      %39 = dma.hbm_to_vmem [thread:$0]  %s1, 1024, %s34, [#allocation6], 64, 64, 4
    $region9: #{tpu_custom_call.1} parent=1 // pred_fallthru
      _
    // Predicated region
    $region10: #{tpu_custom_call.1} parent=1 // pred_check
      _
    $region11: #{tpu_custom_call.1} parent=1 // pred_check_branch
      %41 = sbr.rel (0) target = $region13
    $region12: #{tpu_custom_call.1} parent=1 // pred_region
      _
    $region13: #{tpu_custom_call.1} parent=1 // pred_fallthru
      _
    // Predicated region
    $region14: #{tpu_custom_call.1} parent=1 // pred_check
      _
    $region15: #{tpu_custom_call.1} parent=1 // pred_check_branch
      %43 = sbr.rel (0) target = $region17
    $region16: #{tpu_custom_call.1} parent=1 // pred_region
      %s45 = ssub.s32 1024, 1024
      %46 = vsyncadd [#allocation6], %s45
      %s47 = sshll.u32 [#allocation7], 4
      %s48 = int_to_ptr.vmem [resolvable:$true] %s47
      %53 = dma.hbm_to_vmem [thread:$0]  %s3, 1024, %s48, [#allocation6], 64, 64, 4
    $region17: #{tpu_custom_call.1} parent=1 // pred_fallthru
      _
    // Predicated region
    $region18: #{tpu_custom_call.1} parent=1 // pred_check
      _
    $region19: #{tpu_custom_call.1} parent=1 // pred_check_branch
      %55 = sbr.rel (0) target = $region21
    $region20: #{tpu_custom_call.1} parent=1 // pred_region
      _
    $region21: #{tpu_custom_call.1} parent=1 // pred_fallthru
      _
    // Predicated region
    $region22: #{tpu_custom_call.1} parent=1 // pred_check
      _
    $region23: #{tpu_custom_call.1} parent=1 // pred_check_branch
      %57 = sbr.rel (0) target = $region25
    $region24: #{tpu_custom_call.1} parent=1 // pred_region
      %s59 = ssub.s32 1024, 1024
      %60 = vsyncadd [#allocation9], %s59
      %s61 = sshll.u32 [#allocation8], 4
      %s62 = int_to_ptr.vmem [resolvable:$true] %s61
      %67 = dma.hbm_to_vmem [thread:$0]  %s5, 1024, %s62, [#allocation9], 64, 64, 4
    $region25: #{tpu_custom_call.1} parent=1 // pred_fallthru
      _
    // Predicated region
    $region26: #{tpu_custom_call.1} parent=1 // pred_check
      _
    $region27: #{tpu_custom_call.1} parent=1 // pred_check_branch
      %69 = sbr.rel (0) target = $region29
    $region28: #{tpu_custom_call.1} parent=1 // pred_region
      _
    $region29: #{tpu_custom_call.1} parent=1 // pred_fallthru
      _
    // Predicated region
    $region30: #{tpu_custom_call.1} parent=1 // pred_check
      _
    $region31: #{tpu_custom_call.1} parent=1 // pred_check_branch
      %71 = sbr.rel (0) target = $region33
    $region32: #{tpu_custom_call.1} parent=1 // pred_region
      %72 = dma.done [#allocation3], 256
    $region33: #{tpu_custom_call.1} parent=1 // pred_fallthru
      _
    // Predicated region
    $region34: #{tpu_custom_call.1} parent=1 // pred_check
      _
    $region35: #{tpu_custom_call.1} parent=1 // pred_check_branch
      %74 = sbr.rel (0) target = $region37
    $region36: #{tpu_custom_call.1} parent=1 // pred_region
      %75 = dma.done [#allocation6], 1024
    $region37: #{tpu_custom_call.1} parent=1 // pred_fallthru
      _
    // Predicated region
    $region38: #{tpu_custom_call.1} parent=1 // pred_check
      _
    $region39: #{tpu_custom_call.1} parent=1 // pred_check_branch
      %77 = sbr.rel (0) target = $region41
    $region40: #{tpu_custom_call.1} parent=1 // pred_region
      %78 = dma.done [#allocation6], 1024
    $region41: #{tpu_custom_call.1} parent=1 // pred_fallthru
      _
    // Predicated region
    $region42: #{tpu_custom_call.1} parent=1 // pred_check
      _
    $region43: #{tpu_custom_call.1} parent=1 // pred_check_branch
      %80 = sbr.rel (0) target = $region45
    $region44: #{tpu_custom_call.1} parent=1 // pred_region
      %81 = dma.done [#allocation9], 1024
    $region45: #{tpu_custom_call.1} parent=1 // pred_fallthru
      _
    %v83 = vld [vmem:[#allocation2] sm:$0xff]
    %v84 = vld [vmem:[#allocation2 + $0x8] sm:$0xff]
    %v85 = vpack.c.bf16 %v84, %v83
    %v86 = vld [vmem:[#allocation5] sm:$0xf]
    %v87 = vld [vmem:[#allocation5 + $0x4] sm:$0xf]
    %v88 = vld [vmem:[#allocation5 + $0x8] sm:$0xf]
    %v89 = vld [vmem:[#allocation5 + $0xc] sm:$0xf]
    %v90 = vld [vmem:[#allocation5 + $0x10] sm:$0xf]
    %v91 = vld [vmem:[#allocation5 + $0x14] sm:$0xf]
    %v92 = vld [vmem:[#allocation5 + $0x18] sm:$0xf]
    %v93 = vld [vmem:[#allocation5 + $0x1c] sm:$0xf]
    %v94 = vld [vmem:[#allocation5 + $0x20] sm:$0xf]
    %v95 = vld [vmem:[#allocation5 + $0x24] sm:$0xf]
    %v96 = vld [vmem:[#allocation5 + $0x28] sm:$0xf]
    %v97 = vld [vmem:[#allocation5 + $0x2c] sm:$0xf]
    %v98 = vld [vmem:[#allocation5 + $0x30] sm:$0xf]
    %v99 = vld [vmem:[#allocation5 + $0x34] sm:$0xf]
    %v100 = vld [vmem:[#allocation5 + $0x38] sm:$0xf]
    %v101 = vld [vmem:[#allocation5 + $0x3c] sm:$0xf]
    %v102 = vld [vmem:[%s2] sm:$0x1]
    %v104 = vlaneseq
    %v105 = vshrl.u32 %v104, 7
    %v106 = vsub.s32 0, %v105
    %v107 = vrot.slane %v102, %v106
    %v125 = vunpack.c.l.b16 %v86
    %v126 = vunpack.c.l.b16 %v87
    %v127 = vunpack.c.l.b16 %v88
    %v128 = vunpack.c.l.b16 %v89
    %v129 = vunpack.c.l.b16 %v90
    %v130 = vunpack.c.l.b16 %v91
    %v131 = vunpack.c.l.b16 %v92
    %v132 = vunpack.c.l.b16 %v93
    %v133 = vunpack.c.l.b16 %v94
    %v134 = vunpack.c.l.b16 %v95
    %v135 = vunpack.c.l.b16 %v96
    %v136 = vunpack.c.l.b16 %v97
    %v137 = vunpack.c.l.b16 %v98
    %v138 = vunpack.c.l.b16 %v99
    %v139 = vunpack.c.l.b16 %v100
    %v140 = vunpack.c.l.b16 %v101
    %v141 = vpack.c.b16 %v126, %v125
    %v142 = vpack.c.b16 %v128, %v127
    %v143 = vpack.c.b16 %v130, %v129
    %v144 = vpack.c.b16 %v132, %v131
    %v145 = vpack.c.b16 %v134, %v133
    %v146 = vpack.c.b16 %v136, %v135
    %v147 = vpack.c.b16 %v138, %v137
    %v148 = vpack.c.b16 %v140, %v139
    %157 = vmatprep.subr.bf16.mxu0 0
    %158 = vmatpush1.bf16.msra.mxu0 %v141
    %159 = vmatprep.subr.bf16.mxu0 0
    %160 = vmatpush1.bf16.msra.mxu0 %v142
    %161 = vmatprep.subr.bf16.mxu0 0
    %162 = vmatpush1.bf16.msra.mxu0 %v143
    %163 = vmatprep.subr.bf16.mxu0 0
    %164 = vmatpush1.bf16.msra.mxu0 %v144
    %165 = vmatprep.subr.bf16.mxu0 0
    %166 = vmatpush1.bf16.msra.mxu0 %v145
    %167 = vmatprep.subr.bf16.mxu0 0
    %168 = vmatpush1.bf16.msra.mxu0 %v146
    %169 = vmatprep.subr.bf16.mxu0 0
    %170 = vmatpush1.bf16.msra.mxu0 %v147
    %171 = vmatprep.subr.bf16.mxu0 0
    %172 = vmatpush1.bf16.msra.mxu0 %v148
    %173 = vmatprep.subr.bf16.mxu0 0
    %174 = vmatpush1.bf16.msra.mxu0 0
    %175 = vmatprep.subr.bf16.mxu0 0
    %176 = vmatpush1.bf16.msra.mxu0 0
    %177 = vmatprep.subr.bf16.mxu0 0
    %178 = vmatpush1.bf16.msra.mxu0 0
    %179 = vmatprep.subr.bf16.mxu0 0
    %180 = vmatpush1.bf16.msra.mxu0 0
    %181 = vmatprep.subr.bf16.mxu0 0
    %182 = vmatpush1.bf16.msra.mxu0 0
    %183 = vmatprep.subr.bf16.mxu0 0
    %184 = vmatpush1.bf16.msra.mxu0 0
    %185 = vmatprep.subr.bf16.mxu0 0
    %186 = vmatpush1.bf16.msra.mxu0 0
    %187 = vmatprep.subr.bf16.mxu0 0
    %188 = vmatpush1.bf16.msra.mxu0 0
    %189 = vmatprep.mubr.bf16.mxu0 0
    %190 = vmatmul.mubr.bf16.gmra.mrb[0].mxu0 %v85
    %v191 = vpop.f32.mrb[0].mxu0
    %v192 = vadd.f32 %v107, %v191
    %v193 = vpop.f32.mrb[0].mxu0
    %v194 = vpop.f32.mrb[0].mxu0
    %v195 = vadd.f32 %v107, %v194
    %v196 = vpop.f32.mrb[0].mxu0
    %197 = vdwg.mxu0
    %v198 = vmax.f32 %v192, 0.0
    %v199 = vmax.f32 %v195, 0.0
    %v200 = vpack.c.bf16 %v199, %v198
    %v201 = vld [vmem:[#allocation7] sm:$0xf]
    %v202 = vld [vmem:[#allocation7 + $0x4] sm:$0xf]
    %v203 = vld [vmem:[#allocation7 + $0x8] sm:$0xf]
    %v204 = vld [vmem:[#allocation7 + $0xc] sm:$0xf]
    %v205 = vld [vmem:[#allocation7 + $0x10] sm:$0xf]
    %v206 = vld [vmem:[#allocation7 + $0x14] sm:$0xf]
    %v207 = vld [vmem:[#allocation7 + $0x18] sm:$0xf]
    %v208 = vld [vmem:[#allocation7 + $0x1c] sm:$0xf]
    %v209 = vld [vmem:[#allocation7 + $0x20] sm:$0xf]
    %v210 = vld [vmem:[#allocation7 + $0x24] sm:$0xf]
    %v211 = vld [vmem:[#allocation7 + $0x28] sm:$0xf]
    %v212 = vld [vmem:[#allocation7 + $0x2c] sm:$0xf]
    %v213 = vld [vmem:[#allocation7 + $0x30] sm:$0xf]
    %v214 = vld [vmem:[#allocation7 + $0x34] sm:$0xf]
    %v215 = vld [vmem:[#allocation7 + $0x38] sm:$0xf]
    %v216 = vld [vmem:[#allocation7 + $0x3c] sm:$0xf]
    %v217 = vld [vmem:[%s4] sm:$0x1]
    %v219 = vlaneseq
    %v220 = vshrl.u32 %v219, 7
    %v221 = vsub.s32 0, %v220
    %v222 = vrot.slane %v217, %v221
    %v240 = vunpack.c.l.b16 %v201
    %v241 = vunpack.c.l.b16 %v202
    %v242 = vunpack.c.l.b16 %v203
    %v243 = vunpack.c.l.b16 %v204
    %v244 = vunpack.c.l.b16 %v205
    %v245 = vunpack.c.l.b16 %v206
    %v246 = vunpack.c.l.b16 %v207
    %v247 = vunpack.c.l.b16 %v208
    %v248 = vunpack.c.l.b16 %v209
    %v249 = vunpack.c.l.b16 %v210
    %v250 = vunpack.c.l.b16 %v211
    %v251 = vunpack.c.l.b16 %v212
    %v252 = vunpack.c.l.b16 %v213
    %v253 = vunpack.c.l.b16 %v214
    %v254 = vunpack.c.l.b16 %v215
    %v255 = vunpack.c.l.b16 %v216
    %v256 = vpack.c.b16 %v241, %v240
    %v257 = vpack.c.b16 %v243, %v242
    %v258 = vpack.c.b16 %v245, %v244
    %v259 = vpack.c.b16 %v247, %v246
    %v260 = vpack.c.b16 %v249, %v248
    %v261 = vpack.c.b16 %v251, %v250
    %v262 = vpack.c.b16 %v253, %v252
    %v263 = vpack.c.b16 %v255, %v254
    %272 = vmatprep.subr.bf16.mxu0 0
    %273 = vmatpush1.bf16.msra.mxu0 %v256
    %274 = vmatprep.subr.bf16.mxu0 0
    %275 = vmatpush1.bf16.msra.mxu0 %v257
    %276 = vmatprep.subr.bf16.mxu0 0
    %277 = vmatpush1.bf16.msra.mxu0 %v258
    %278 = vmatprep.subr.bf16.mxu0 0
    %279 = vmatpush1.bf16.msra.mxu0 %v259
    %280 = vmatprep.subr.bf16.mxu0 0
    %281 = vmatpush1.bf16.msra.mxu0 %v260
    %282 = vmatprep.subr.bf16.mxu0 0
    %283 = vmatpush1.bf16.msra.mxu0 %v261
    %284 = vmatprep.subr.bf16.mxu0 0
    %285 = vmatpush1.bf16.msra.mxu0 %v262
    %286 = vmatprep.subr.bf16.mxu0 0
    %287 = vmatpush1.bf16.msra.mxu0 %v263
    %288 = vmatprep.subr.bf16.mxu0 0
    %289 = vmatpush1.bf16.msra.mxu0 0
    %290 = vmatprep.subr.bf16.mxu0 0
    %291 = vmatpush1.bf16.msra.mxu0 0
    %292 = vmatprep.subr.bf16.mxu0 0
    %293 = vmatpush1.bf16.msra.mxu0 0
    %294 = vmatprep.subr.bf16.mxu0 0
    %295 = vmatpush1.bf16.msra.mxu0 0
    %296 = vmatprep.subr.bf16.mxu0 0
    %297 = vmatpush1.bf16.msra.mxu0 0
    %298 = vmatprep.subr.bf16.mxu0 0
    %299 = vmatpush1.bf16.msra.mxu0 0
    %300 = vmatprep.subr.bf16.mxu0 0
    %301 = vmatpush1.bf16.msra.mxu0 0
    %302 = vmatprep.subr.bf16.mxu0 0
    %303 = vmatpush1.bf16.msra.mxu0 0
    %304 = vmatprep.mubr.bf16.mxu0 0
    %305 = vmatmul.mubr.bf16.gmra.mrb[0].mxu0 %v200
    %v306 = vpop.f32.mrb[0].mxu0
    %v307 = vadd.f32 %v222, %v306
    %v308 = vpop.f32.mrb[0].mxu0
    %v309 = vpop.f32.mrb[0].mxu0
    %v310 = vadd.f32 %v222, %v309
    %v311 = vpop.f32.mrb[0].mxu0
    %312 = vdwg.mxu0
    %v313 = vmax.f32 %v307, 0.0
    %v314 = vmax.f32 %v310, 0.0
    %v315 = vpack.c.bf16 %v314, %v313
    %v316 = vld [vmem:[#allocation8] sm:$0xf]
    %v317 = vld [vmem:[#allocation8 + $0x4] sm:$0xf]
    %v318 = vld [vmem:[#allocation8 + $0x8] sm:$0xf]
    %v319 = vld [vmem:[#allocation8 + $0xc] sm:$0xf]
    %v320 = vld [vmem:[#allocation8 + $0x10] sm:$0xf]
    %v321 = vld [vmem:[#allocation8 + $0x14] sm:$0xf]
    %v322 = vld [vmem:[#allocation8 + $0x18] sm:$0xf]
    %v323 = vld [vmem:[#allocation8 + $0x1c] sm:$0xf]
    %v324 = vld [vmem:[#allocation8 + $0x20] sm:$0xf]
    %v325 = vld [vmem:[#allocation8 + $0x24] sm:$0xf]
    %v326 = vld [vmem:[#allocation8 + $0x28] sm:$0xf]
    %v327 = vld [vmem:[#allocation8 + $0x2c] sm:$0xf]
    %v328 = vld [vmem:[#allocation8 + $0x30] sm:$0xf]
    %v329 = vld [vmem:[#allocation8 + $0x34] sm:$0xf]
    %v330 = vld [vmem:[#allocation8 + $0x38] sm:$0xf]
    %v331 = vld [vmem:[#allocation8 + $0x3c] sm:$0xf]
    %v332 = vld [vmem:[%s6] sm:$0x1]
    %v334 = vlaneseq
    %v335 = vshrl.u32 %v334, 7
    %v336 = vsub.s32 0, %v335
    %v337 = vrot.slane %v332, %v336
    %v355 = vunpack.c.l.b16 %v316
    %v356 = vunpack.c.l.b16 %v317
    %v357 = vunpack.c.l.b16 %v318
    %v358 = vunpack.c.l.b16 %v319
    %v359 = vunpack.c.l.b16 %v320
    %v360 = vunpack.c.l.b16 %v321
    %v361 = vunpack.c.l.b16 %v322
    %v362 = vunpack.c.l.b16 %v323
    %v363 = vunpack.c.l.b16 %v324
    %v364 = vunpack.c.l.b16 %v325
    %v365 = vunpack.c.l.b16 %v326
    %v366 = vunpack.c.l.b16 %v327
    %v367 = vunpack.c.l.b16 %v328
    %v368 = vunpack.c.l.b16 %v329
    %v369 = vunpack.c.l.b16 %v330
    %v370 = vunpack.c.l.b16 %v331
    %v371 = vpack.c.b16 %v356, %v355
    %v372 = vpack.c.b16 %v358, %v357
    %v373 = vpack.c.b16 %v360, %v359
    %v374 = vpack.c.b16 %v362, %v361
    %v375 = vpack.c.b16 %v364, %v363
    %v376 = vpack.c.b16 %v366, %v365
    %v377 = vpack.c.b16 %v368, %v367
    %v378 = vpack.c.b16 %v370, %v369
    %387 = vmatprep.subr.bf16.mxu0 0
    %388 = vmatpush1.bf16.msra.mxu0 %v371
    %389 = vmatprep.subr.bf16.mxu0 0
    %390 = vmatpush1.bf16.msra.mxu0 %v372
    %391 = vmatprep.subr.bf16.mxu0 0
    %392 = vmatpush1.bf16.msra.mxu0 %v373
    %393 = vmatprep.subr.bf16.mxu0 0
    %394 = vmatpush1.bf16.msra.mxu0 %v374
    %395 = vmatprep.subr.bf16.mxu0 0
    %396 = vmatpush1.bf16.msra.mxu0 %v375
    %397 = vmatprep.subr.bf16.mxu0 0
    %398 = vmatpush1.bf16.msra.mxu0 %v376
    %399 = vmatprep.subr.bf16.mxu0 0
    %400 = vmatpush1.bf16.msra.mxu0 %v377
    %401 = vmatprep.subr.bf16.mxu0 0
    %402 = vmatpush1.bf16.msra.mxu0 %v378
    %403 = vmatprep.subr.bf16.mxu0 0
    %404 = vmatpush1.bf16.msra.mxu0 0
    %405 = vmatprep.subr.bf16.mxu0 0
    %406 = vmatpush1.bf16.msra.mxu0 0
    %407 = vmatprep.subr.bf16.mxu0 0
    %408 = vmatpush1.bf16.msra.mxu0 0
    %409 = vmatprep.subr.bf16.mxu0 0
    %410 = vmatpush1.bf16.msra.mxu0 0
    %411 = vmatprep.subr.bf16.mxu0 0
    %412 = vmatpush1.bf16.msra.mxu0 0
    %413 = vmatprep.subr.bf16.mxu0 0
    %414 = vmatpush1.bf16.msra.mxu0 0
    %415 = vmatprep.subr.bf16.mxu0 0
    %416 = vmatpush1.bf16.msra.mxu0 0
    %417 = vmatprep.subr.bf16.mxu0 0
    %418 = vmatpush1.bf16.msra.mxu0 0
    %419 = vmatprep.mubr.bf16.mxu0 0
    %420 = vmatmul.mubr.bf16.gmra.mrb[0].mxu0 %v315
    %v421 = vpop.f32.mrb[0].mxu0
    %v422 = vadd.f32 %v337, %v421
    %v423 = vpop.f32.mrb[0].mxu0
    %v424 = vpop.f32.mrb[0].mxu0
    %v425 = vadd.f32 %v337, %v424
    %v426 = vpop.f32.mrb[0].mxu0
    %427 = vdwg.mxu0
    %v428 = vmul.f32 %v422, %v422
    %v429 = vmul.f32 %v425, %v425
    %430 = vadd.xlane.f32.xlu0 %v428
    %v431 = vpop.xlane.xlu0 %430
    %432 = vadd.xlane.f32.xlu0 %v429
    %v433 = vpop.xlane.xlu0 %432
    %v434 = vmax.f32 %v431, 1e-24
    %v435 = vmax.f32 %v433, 1e-24
    %v436 = vrsqrt.pop %v434
    %v437 = vrsqrt.pop %v435
    %v438 = vmul.f32 %v422, %v436
    %v439 = vmul.f32 %v425, %v437
    %440 = vst [vmem:[#allocation10] sm:$0xff] %v438
    %441 = vst [vmem:[#allocation10 + $0x8] sm:$0xff] %v439
    // Predicated region
    $region46: #{tpu_custom_call.1} parent=1 // pred_check
      _
    $region47: #{tpu_custom_call.1} parent=1 // pred_check_branch
      %443 = sbr.rel (0) target = $region49
    $region48: #{tpu_custom_call.1} parent=1 // pred_region
      %s445 = ssub.s32 256, 256
      %446 = vsyncadd [#allocation4], %s445
      %s447 = sshll.u32 [#allocation10], 4
      %s448 = int_to_ptr.vmem [resolvable:$true] %s447
      %453 = dma.vmem_to_hbm [thread:$0]  %s448, 256, %s7, [#allocation4], 128, 128, 8
    $region49: #{tpu_custom_call.1} parent=1 // pred_fallthru
      _
    // Predicated region
    $region50: #{tpu_custom_call.1} parent=1 // pred_check
      _
    $region51: #{tpu_custom_call.1} parent=1 // pred_check_branch
      %455 = sbr.rel (0) target = $region53
    $region52: #{tpu_custom_call.1} parent=1 // pred_region
      %456 = dma.done [#allocation4], 256
    $region53: #{tpu_custom_call.1} parent=1 // pred_fallthru
      _
    %457 = vsyncpa [#allocation3], 1
    %458 = vsyncpa [#allocation6], 1
    %459 = vsyncpa [#allocation9], 1
    %460 = vsyncpa [#allocation4], 1

// kernel: tpu_custom_call.1
$region0: #{tpu_custom_call.1}
  #allocation0 [shape = 'u32[]', space=smem, size = 0x4, offset = 0x4, fixed_abs, tag = 'smem constant byte address 0x4 - core index']
  #allocation1 [shape = 'u32[144,128]{1,0:T(1,128)}', space=vmem, size = 0x12000, scoped, tag = 'internal scratch']
  %s0 = inlined_call_operand.hbm [shape: f32[16,128], index: 0, kind: input, shape index: {}]
  %s1 = inlined_call_operand.hbm [shape: bf16[128,128], index: 1, kind: input, shape index: {}]
  %s2 = inlined_call_operand.vmem [shape: f32[1,128], index: 2, kind: input, shape index: {}]
  %s3 = inlined_call_operand.hbm [shape: bf16[128,128], index: 3, kind: input, shape index: {}]
  %s4 = inlined_call_operand.vmem [shape: f32[1,128], index: 4, kind: input, shape index: {}]
  %s5 = inlined_call_operand.hbm [shape: bf16[128,128], index: 5, kind: input, shape index: {}]
  %s6 = inlined_call_operand.vmem [shape: f32[1,128], index: 6, kind: input, shape index: {}]
  %s7 = inlined_call_operand.hbm [shape: f32[16,128], index: 7, kind: output, shape index: {}]
  %s8 = sld [smem:[#allocation0]]
  $region54: #{tpu_custom_call.1} parent=0
    _
  %s10 = ssub.s32 1, %s8
  %s11 = scalar_select 0, %s10, %s8
  $region1: #{tpu_custom_call.1} parent=0
    #allocation2 [shape = 'u8[8192]{0}', space=vmem, size = 0x2000, scoped, tag = 'input window, operand 0, single buffered']
    #allocation3 [shape = 's32[1]{0}', space=sflag, size = 0x4, scoped, tag = 'scoped memory for tpu_custom_call.1']
    #allocation4 [shape = 's32[1]{0}', space=sflag, size = 0x4, scoped, tag = 'scoped memory for tpu_custom_call.1']
    #allocation5 [shape = 'u8[32768]{0}', space=vmem, size = 0x8000, scoped, tag = 'input window, operand 1, single buffered']
    #allocation6 [shape = 's32[1]{0}', space=sflag, size = 0x4, scoped, tag = 'scoped memory for tpu_custom_call.1']
    #allocation7 [shape = 'u8[32768]{0}', space=vmem, size = 0x8000, scoped, tag = 'input window, operand 3, single buffered']
    #allocation8 [shape = 'u8[32768]{0}', space=vmem, size = 0x8000, scoped, tag = 'input window, operand 5, single buffered']
    #allocation9 [shape = 's32[1]{0}', space=sflag, size = 0x4, scoped, tag = 'scoped memory for tpu_custom_call.1']
    #allocation10 [shape = 'u8[8192]{0}', space=vmem, size = 0x2000, scoped, tag = 'output window, operand 0, single buffered']
    %12 = vsyncpa [#allocation3], 0
    %13 = vsyncpa [#allocation6], 0
    %14 = vsyncpa [#allocation9], 0
    %15 = vsyncpa [#allocation4], 0
    // Predicated region
    $region2: #{tpu_custom_call.1} parent=1 // pred_check
      _
    $region3: #{tpu_custom_call.1} parent=1 // pred_check_branch
      %17 = sbr.rel (0) target = $region5
    $region4: #{tpu_custom_call.1} parent=1 // pred_region
      %s19 = ssub.s32 256, 256
      %20 = vsyncadd [#allocation3], %s19
      %s21 = sshll.u32 [#allocation2], 4
      %s22 = int_to_ptr.vmem [resolvable:$true] %s21
      %27 = dma.hbm_to_vmem [thread:$0]  %s0, 256, %s22, [#allocation3], 128, 128, 8
    $region5: #{tpu_custom_call.1} parent=1 // pred_fallthru
      _
    // Predicated region
    $region6: #{tpu_custom_call.1} parent=1 // pred_check
      _
    $region7: #{tpu_custom_call.1} parent=1 // pred_check_branch
      %29 = sbr.rel (0) target = $region9
    $region8: #{tpu_custom_call.1} parent=1 // pred_region
      %s31 = ssub.s32 1024, 1024
      %32 = vsyncadd [#allocation6], %s31
      %s33 = sshll.u32 [#allocation5], 4
      %s34 = int_to_ptr.vmem [resolvable:$true] %s33
      %39 = dma.hbm_to_vmem [thread:$0]  %s1, 1024, %s34, [#allocation6], 64, 64, 4
    $region9: #{tpu_custom_call.1} parent=1 // pred_fallthru
      _
    // Predicated region
    $region10: #{tpu_custom_call.1} parent=1 // pred_check
      _
    $region11: #{tpu_custom_call.1} parent=1 // pred_check_branch
      %41 = sbr.rel (0) target = $region13
    $region12: #{tpu_custom_call.1} parent=1 // pred_region
      _
    $region13: #{tpu_custom_call.1} parent=1 // pred_fallthru
      _
    // Predicated region
    $region14: #{tpu_custom_call.1} parent=1 // pred_check
      _
    $region15: #{tpu_custom_call.1} parent=1 // pred_check_branch
      %43 = sbr.rel (0) target = $region17
    $region16: #{tpu_custom_call.1} parent=1 // pred_region
      %s45 = ssub.s32 1024, 1024
      %46 = vsyncadd [#allocation6], %s45
      %s47 = sshll.u32 [#allocation7], 4
      %s48 = int_to_ptr.vmem [resolvable:$true] %s47
      %53 = dma.hbm_to_vmem [thread:$0]  %s3, 1024, %s48, [#allocation6], 64, 64, 4
    $region17: #{tpu_custom_call.1} parent=1 // pred_fallthru
      _
    // Predicated region
    $region18: #{tpu_custom_call.1} parent=1 // pred_check
      _
    $region19: #{tpu_custom_call.1} parent=1 // pred_check_branch
      %55 = sbr.rel (0) target = $region21
    $region20: #{tpu_custom_call.1} parent=1 // pred_region
      _
    $region21: #{tpu_custom_call.1} parent=1 // pred_fallthru
      _
    // Predicated region
    $region22: #{tpu_custom_call.1} parent=1 // pred_check
      _
    $region23: #{tpu_custom_call.1} parent=1 // pred_check_branch
      %57 = sbr.rel (0) target = $region25
    $region24: #{tpu_custom_call.1} parent=1 // pred_region
      %s59 = ssub.s32 1024, 1024
      %60 = vsyncadd [#allocation9], %s59
      %s61 = sshll.u32 [#allocation8], 4
      %s62 = int_to_ptr.vmem [resolvable:$true] %s61
      %67 = dma.hbm_to_vmem [thread:$0]  %s5, 1024, %s62, [#allocation9], 64, 64, 4
    $region25: #{tpu_custom_call.1} parent=1 // pred_fallthru
      _
    // Predicated region
    $region26: #{tpu_custom_call.1} parent=1 // pred_check
      _
    $region27: #{tpu_custom_call.1} parent=1 // pred_check_branch
      %69 = sbr.rel (0) target = $region29
    $region28: #{tpu_custom_call.1} parent=1 // pred_region
      _
    $region29: #{tpu_custom_call.1} parent=1 // pred_fallthru
      _
    // Predicated region
    $region30: #{tpu_custom_call.1} parent=1 // pred_check
      _
    $region31: #{tpu_custom_call.1} parent=1 // pred_check_branch
      %71 = sbr.rel (0) target = $region33
    $region32: #{tpu_custom_call.1} parent=1 // pred_region
      %72 = dma.done [#allocation3], 256
    $region33: #{tpu_custom_call.1} parent=1 // pred_fallthru
      _
    // Predicated region
    $region34: #{tpu_custom_call.1} parent=1 // pred_check
      _
    $region35: #{tpu_custom_call.1} parent=1 // pred_check_branch
      %74 = sbr.rel (0) target = $region37
    $region36: #{tpu_custom_call.1} parent=1 // pred_region
      %75 = dma.done [#allocation6], 1024
    $region37: #{tpu_custom_call.1} parent=1 // pred_fallthru
      _
    // Predicated region
    $region38: #{tpu_custom_call.1} parent=1 // pred_check
      _
    $region39: #{tpu_custom_call.1} parent=1 // pred_check_branch
      %77 = sbr.rel (0) target = $region41
    $region40: #{tpu_custom_call.1} parent=1 // pred_region
      %78 = dma.done [#allocation6], 1024
    $region41: #{tpu_custom_call.1} parent=1 // pred_fallthru
      _
    // Predicated region
    $region42: #{tpu_custom_call.1} parent=1 // pred_check
      _
    $region43: #{tpu_custom_call.1} parent=1 // pred_check_branch
      %80 = sbr.rel (0) target = $region45
    $region44: #{tpu_custom_call.1} parent=1 // pred_region
      %81 = dma.done [#allocation9], 1024
    $region45: #{tpu_custom_call.1} parent=1 // pred_fallthru
      _
    %v83 = vld [vmem:[#allocation2] sm:$0xff]
    %v84 = vld [vmem:[#allocation2 + $0x8] sm:$0xff]
    %v85 = vpack.c.bf16 %v84, %v83
    %v86 = vld [vmem:[#allocation5] sm:$0xf]
    %v87 = vld [vmem:[#allocation5 + $0x4] sm:$0xf]
    %v88 = vld [vmem:[#allocation5 + $0x8] sm:$0xf]
    %v89 = vld [vmem:[#allocation5 + $0xc] sm:$0xf]
    %v90 = vld [vmem:[#allocation5 + $0x10] sm:$0xf]
    %v91 = vld [vmem:[#allocation5 + $0x14] sm:$0xf]
    %v92 = vld [vmem:[#allocation5 + $0x18] sm:$0xf]
    %v93 = vld [vmem:[#allocation5 + $0x1c] sm:$0xf]
    %v94 = vld [vmem:[#allocation5 + $0x20] sm:$0xf]
    %v95 = vld [vmem:[#allocation5 + $0x24] sm:$0xf]
    %v96 = vld [vmem:[#allocation5 + $0x28] sm:$0xf]
    %v97 = vld [vmem:[#allocation5 + $0x2c] sm:$0xf]
    %v98 = vld [vmem:[#allocation5 + $0x30] sm:$0xf]
    %v99 = vld [vmem:[#allocation5 + $0x34] sm:$0xf]
    %v100 = vld [vmem:[#allocation5 + $0x38] sm:$0xf]
    %v101 = vld [vmem:[#allocation5 + $0x3c] sm:$0xf]
    %v102 = vld [vmem:[%s2] sm:$0x1]
    %v104 = vlaneseq
    %v105 = vshrl.u32 %v104, 7
    %v106 = vsub.s32 0, %v105
    %v107 = vrot.slane %v102, %v106
    %v125 = vunpack.c.l.b16 %v86
    %v126 = vunpack.c.l.b16 %v87
    %v127 = vunpack.c.l.b16 %v88
    %v128 = vunpack.c.l.b16 %v89
    %v129 = vunpack.c.l.b16 %v90
    %v130 = vunpack.c.l.b16 %v91
    %v131 = vunpack.c.l.b16 %v92
    %v132 = vunpack.c.l.b16 %v93
    %v133 = vunpack.c.l.b16 %v94
    %v134 = vunpack.c.l.b16 %v95
    %v135 = vunpack.c.l.b16 %v96
    %v136 = vunpack.c.l.b16 %v97
    %v137 = vunpack.c.l.b16 %v98
    %v138 = vunpack.c.l.b16 %v99
    %v139 = vunpack.c.l.b16 %v100
    %v140 = vunpack.c.l.b16 %v101
    %v141 = vpack.c.b16 %v126, %v125
    %v142 = vpack.c.b16 %v128, %v127
    %v143 = vpack.c.b16 %v130, %v129
    %v144 = vpack.c.b16 %v132, %v131
    %v145 = vpack.c.b16 %v134, %v133
    %v146 = vpack.c.b16 %v136, %v135
    %v147 = vpack.c.b16 %v138, %v137
    %v148 = vpack.c.b16 %v140, %v139
    %157 = vmatprep.subr.bf16.mxu0 0
    %158 = vmatpush1.bf16.msra.mxu0 %v141
    %159 = vmatprep.subr.bf16.mxu0 0
    %160 = vmatpush1.bf16.msra.mxu0 %v142
    %161 = vmatprep.subr.bf16.mxu0 0
    %162 = vmatpush1.bf16.msra.mxu0 %v143
    %163 = vmatprep.subr.bf16.mxu0 0
    %164 = vmatpush1.bf16.msra.mxu0 %v144
    %165 = vmatprep.subr.bf16.mxu0 0
    %166 = vmatpush1.bf16.msra.mxu0 %v145
    %167 = vmatprep.subr.bf16.mxu0 0
    %168 = vmatpush1.bf16.msra.mxu0 %v146
    %169 = vmatprep.subr.bf16.mxu0 0
    %170 = vmatpush1.bf16.msra.mxu0 %v147
    %171 = vmatprep.subr.bf16.mxu0 0
    %172 = vmatpush1.bf16.msra.mxu0 %v148
    %173 = vmatprep.subr.bf16.mxu0 0
    %174 = vmatpush1.bf16.msra.mxu0 0
    %175 = vmatprep.subr.bf16.mxu0 0
    %176 = vmatpush1.bf16.msra.mxu0 0
    %177 = vmatprep.subr.bf16.mxu0 0
    %178 = vmatpush1.bf16.msra.mxu0 0
    %179 = vmatprep.subr.bf16.mxu0 0
    %180 = vmatpush1.bf16.msra.mxu0 0
    %181 = vmatprep.subr.bf16.mxu0 0
    %182 = vmatpush1.bf16.msra.mxu0 0
    %183 = vmatprep.subr.bf16.mxu0 0
    %184 = vmatpush1.bf16.msra.mxu0 0
    %185 = vmatprep.subr.bf16.mxu0 0
    %186 = vmatpush1.bf16.msra.mxu0 0
    %187 = vmatprep.subr.bf16.mxu0 0
    %188 = vmatpush1.bf16.msra.mxu0 0
    %189 = vmatprep.mubr.bf16.mxu0 0
    %190 = vmatmul.mubr.bf16.gmra.mrb[0].mxu0 %v85
    %v191 = vpop.f32.mrb[0].mxu0
    %v192 = vadd.f32 %v107, %v191
    %v193 = vpop.f32.mrb[0].mxu0
    %v194 = vpop.f32.mrb[0].mxu0
    %v195 = vadd.f32 %v107, %v194
    %v196 = vpop.f32.mrb[0].mxu0
    %197 = vdwg.mxu0
    %v198 = vmax.f32 %v192, 0.0
    %v199 = vmax.f32 %v195, 0.0
    %v200 = vpack.c.bf16 %v199, %v198
    %v201 = vld [vmem:[#allocation7] sm:$0xf]
    %v202 = vld [vmem:[#allocation7 + $0x4] sm:$0xf]
    %v203 = vld [vmem:[#allocation7 + $0x8] sm:$0xf]
    %v204 = vld [vmem:[#allocation7 + $0xc] sm:$0xf]
    %v205 = vld [vmem:[#allocation7 + $0x10] sm:$0xf]
    %v206 = vld [vmem:[#allocation7 + $0x14] sm:$0xf]
    %v207 = vld [vmem:[#allocation7 + $0x18] sm:$0xf]
    %v208 = vld [vmem:[#allocation7 + $0x1c] sm:$0xf]
    %v209 = vld [vmem:[#allocation7 + $0x20] sm:$0xf]
    %v210 = vld [vmem:[#allocation7 + $0x24] sm:$0xf]
    %v211 = vld [vmem:[#allocation7 + $0x28] sm:$0xf]
    %v212 = vld [vmem:[#allocation7 + $0x2c] sm:$0xf]
    %v213 = vld [vmem:[#allocation7 + $0x30] sm:$0xf]
    %v214 = vld [vmem:[#allocation7 + $0x34] sm:$0xf]
    %v215 = vld [vmem:[#allocation7 + $0x38] sm:$0xf]
    %v216 = vld [vmem:[#allocation7 + $0x3c] sm:$0xf]
    %v217 = vld [vmem:[%s4] sm:$0x1]
    %v219 = vlaneseq
    %v220 = vshrl.u32 %v219, 7
    %v221 = vsub.s32 0, %v220
    %v222 = vrot.slane %v217, %v221
    %v240 = vunpack.c.l.b16 %v201
    %v241 = vunpack.c.l.b16 %v202
    %v242 = vunpack.c.l.b16 %v203
    %v243 = vunpack.c.l.b16 %v204
    %v244 = vunpack.c.l.b16 %v205
    %v245 = vunpack.c.l.b16 %v206
    %v246 = vunpack.c.l.b16 %v207
    %v247 = vunpack.c.l.b16 %v208
    %v248 = vunpack.c.l.b16 %v209
    %v249 = vunpack.c.l.b16 %v210
    %v250 = vunpack.c.l.b16 %v211
    %v251 = vunpack.c.l.b16 %v212
    %v252 = vunpack.c.l.b16 %v213
    %v253 = vunpack.c.l.b16 %v214
    %v254 = vunpack.c.l.b16 %v215
    %v255 = vunpack.c.l.b16 %v216
    %v256 = vpack.c.b16 %v241, %v240
    %v257 = vpack.c.b16 %v243, %v242
    %v258 = vpack.c.b16 %v245, %v244
    %v259 = vpack.c.b16 %v247, %v246
    %v260 = vpack.c.b16 %v249, %v248
    %v261 = vpack.c.b16 %v251, %v250
    %v262 = vpack.c.b16 %v253, %v252
    %v263 = vpack.c.b16 %v255, %v254
    %272 = vmatprep.subr.bf16.mxu0 0
    %273 = vmatpush1.bf16.msra.mxu0 %v256
    %274 = vmatprep.subr.bf16.mxu0 0
    %275 = vmatpush1.bf16.msra.mxu0 %v257
    %276 = vmatprep.subr.bf16.mxu0 0
    %277 = vmatpush1.bf16.msra.mxu0 %v258
    %278 = vmatprep.subr.bf16.mxu0 0
    %279 = vmatpush1.bf16.msra.mxu0 %v259
    %280 = vmatprep.subr.bf16.mxu0 0
    %281 = vmatpush1.bf16.msra.mxu0 %v260
    %282 = vmatprep.subr.bf16.mxu0 0
    %283 = vmatpush1.bf16.msra.mxu0 %v261
    %284 = vmatprep.subr.bf16.mxu0 0
    %285 = vmatpush1.bf16.msra.mxu0 %v262
    %286 = vmatprep.subr.bf16.mxu0 0
    %287 = vmatpush1.bf16.msra.mxu0 %v263
    %288 = vmatprep.subr.bf16.mxu0 0
    %289 = vmatpush1.bf16.msra.mxu0 0
    %290 = vmatprep.subr.bf16.mxu0 0
    %291 = vmatpush1.bf16.msra.mxu0 0
    %292 = vmatprep.subr.bf16.mxu0 0
    %293 = vmatpush1.bf16.msra.mxu0 0
    %294 = vmatprep.subr.bf16.mxu0 0
    %295 = vmatpush1.bf16.msra.mxu0 0
    %296 = vmatprep.subr.bf16.mxu0 0
    %297 = vmatpush1.bf16.msra.mxu0 0
    %298 = vmatprep.subr.bf16.mxu0 0
    %299 = vmatpush1.bf16.msra.mxu0 0
    %300 = vmatprep.subr.bf16.mxu0 0
    %301 = vmatpush1.bf16.msra.mxu0 0
    %302 = vmatprep.subr.bf16.mxu0 0
    %303 = vmatpush1.bf16.msra.mxu0 0
    %304 = vmatprep.mubr.bf16.mxu0 0
    %305 = vmatmul.mubr.bf16.gmra.mrb[0].mxu0 %v200
    %v306 = vpop.f32.mrb[0].mxu0
    %v307 = vadd.f32 %v222, %v306
    %v308 = vpop.f32.mrb[0].mxu0
    %v309 = vpop.f32.mrb[0].mxu0
    %v310 = vadd.f32 %v222, %v309
    %v311 = vpop.f32.mrb[0].mxu0
    %312 = vdwg.mxu0
    %v313 = vmax.f32 %v307, 0.0
    %v314 = vmax.f32 %v310, 0.0
    %v315 = vpack.c.bf16 %v314, %v313
    %v316 = vld [vmem:[#allocation8] sm:$0xf]
    %v317 = vld [vmem:[#allocation8 + $0x4] sm:$0xf]
    %v318 = vld [vmem:[#allocation8 + $0x8] sm:$0xf]
    %v319 = vld [vmem:[#allocation8 + $0xc] sm:$0xf]
    %v320 = vld [vmem:[#allocation8 + $0x10] sm:$0xf]
    %v321 = vld [vmem:[#allocation8 + $0x14] sm:$0xf]
    %v322 = vld [vmem:[#allocation8 + $0x18] sm:$0xf]
    %v323 = vld [vmem:[#allocation8 + $0x1c] sm:$0xf]
    %v324 = vld [vmem:[#allocation8 + $0x20] sm:$0xf]
    %v325 = vld [vmem:[#allocation8 + $0x24] sm:$0xf]
    %v326 = vld [vmem:[#allocation8 + $0x28] sm:$0xf]
    %v327 = vld [vmem:[#allocation8 + $0x2c] sm:$0xf]
    %v328 = vld [vmem:[#allocation8 + $0x30] sm:$0xf]
    %v329 = vld [vmem:[#allocation8 + $0x34] sm:$0xf]
    %v330 = vld [vmem:[#allocation8 + $0x38] sm:$0xf]
    %v331 = vld [vmem:[#allocation8 + $0x3c] sm:$0xf]
    %v332 = vld [vmem:[%s6] sm:$0x1]
    %v334 = vlaneseq
    %v335 = vshrl.u32 %v334, 7
    %v336 = vsub.s32 0, %v335
    %v337 = vrot.slane %v332, %v336
    %v355 = vunpack.c.l.b16 %v316
    %v356 = vunpack.c.l.b16 %v317
    %v357 = vunpack.c.l.b16 %v318
    %v358 = vunpack.c.l.b16 %v319
    %v359 = vunpack.c.l.b16 %v320
    %v360 = vunpack.c.l.b16 %v321
    %v361 = vunpack.c.l.b16 %v322
    %v362 = vunpack.c.l.b16 %v323
    %v363 = vunpack.c.l.b16 %v324
    %v364 = vunpack.c.l.b16 %v325
    %v365 = vunpack.c.l.b16 %v326
    %v366 = vunpack.c.l.b16 %v327
    %v367 = vunpack.c.l.b16 %v328
    %v368 = vunpack.c.l.b16 %v329
    %v369 = vunpack.c.l.b16 %v330
    %v370 = vunpack.c.l.b16 %v331
    %v371 = vpack.c.b16 %v356, %v355
    %v372 = vpack.c.b16 %v358, %v357
    %v373 = vpack.c.b16 %v360, %v359
    %v374 = vpack.c.b16 %v362, %v361
    %v375 = vpack.c.b16 %v364, %v363
    %v376 = vpack.c.b16 %v366, %v365
    %v377 = vpack.c.b16 %v368, %v367
    %v378 = vpack.c.b16 %v370, %v369
    %387 = vmatprep.subr.bf16.mxu0 0
    %388 = vmatpush1.bf16.msra.mxu0 %v371
    %389 = vmatprep.subr.bf16.mxu0 0
    %390 = vmatpush1.bf16.msra.mxu0 %v372
    %391 = vmatprep.subr.bf16.mxu0 0
    %392 = vmatpush1.bf16.msra.mxu0 %v373
    %393 = vmatprep.subr.bf16.mxu0 0
    %394 = vmatpush1.bf16.msra.mxu0 %v374
    %395 = vmatprep.subr.bf16.mxu0 0
    %396 = vmatpush1.bf16.msra.mxu0 %v375
    %397 = vmatprep.subr.bf16.mxu0 0
    %398 = vmatpush1.bf16.msra.mxu0 %v376
    %399 = vmatprep.subr.bf16.mxu0 0
    %400 = vmatpush1.bf16.msra.mxu0 %v377
    %401 = vmatprep.subr.bf16.mxu0 0
    %402 = vmatpush1.bf16.msra.mxu0 %v378
    %403 = vmatprep.subr.bf16.mxu0 0
    %404 = vmatpush1.bf16.msra.mxu0 0
    %405 = vmatprep.subr.bf16.mxu0 0
    %406 = vmatpush1.bf16.msra.mxu0 0
    %407 = vmatprep.subr.bf16.mxu0 0
    %408 = vmatpush1.bf16.msra.mxu0 0
    %409 = vmatprep.subr.bf16.mxu0 0
    %410 = vmatpush1.bf16.msra.mxu0 0
    %411 = vmatprep.subr.bf16.mxu0 0
    %412 = vmatpush1.bf16.msra.mxu0 0
    %413 = vmatprep.subr.bf16.mxu0 0
    %414 = vmatpush1.bf16.msra.mxu0 0
    %415 = vmatprep.subr.bf16.mxu0 0
    %416 = vmatpush1.bf16.msra.mxu0 0
    %417 = vmatprep.subr.bf16.mxu0 0
    %418 = vmatpush1.bf16.msra.mxu0 0
    %419 = vmatprep.mubr.bf16.mxu0 0
    %420 = vmatmul.mubr.bf16.gmra.mrb[0].mxu0 %v315
    %v421 = vpop.f32.mrb[0].mxu0
    %v422 = vadd.f32 %v337, %v421
    %v423 = vpop.f32.mrb[0].mxu0
    %v424 = vpop.f32.mrb[0].mxu0
    %v425 = vadd.f32 %v337, %v424
    %v426 = vpop.f32.mrb[0].mxu0
    %427 = vdwg.mxu0
    %v428 = vmul.f32 %v422, %v422
    %v429 = vmul.f32 %v425, %v425
    %430 = vadd.xlane.f32.xlu0 %v428
    %v431 = vpop.xlane.xlu0 %430
    %432 = vadd.xlane.f32.xlu0 %v429
    %v433 = vpop.xlane.xlu0 %432
    %v434 = vmax.f32 %v431, 1e-24
    %v435 = vmax.f32 %v433, 1e-24
    %v436 = vrsqrt.pop %v434
    %v437 = vrsqrt.pop %v435
    %v438 = vmul.f32 %v422, %v436
    %v439 = vmul.f32 %v425, %v437
    %440 = vst [vmem:[#allocation10] sm:$0xff] %v438
    %441 = vst [vmem:[#allocation10 + $0x8] sm:$0xff] %v439
    // Predicated region
    $region46: #{tpu_custom_call.1} parent=1 // pred_check
      _
    $region47: #{tpu_custom_call.1} parent=1 // pred_check_branch
      %443 = sbr.rel (0) target = $region49
    $region48: #{tpu_custom_call.1} parent=1 // pred_region
      %s445 = ssub.s32 256, 256
      %446 = vsyncadd [#allocation4], %s445
      %s447 = sshll.u32 [#allocation10], 4
      %s448 = int_to_ptr.vmem [resolvable:$true] %s447
      %453 = dma.vmem_to_hbm [thread:$0]  %s448, 256, %s7, [#allocation4], 128, 128, 8
    $region49: #{tpu_custom_call.1} parent=1 // pred_fallthru
      _
    // Predicated region
    $region50: #{tpu_custom_call.1} parent=1 // pred_check
      _
    $region51: #{tpu_custom_call.1} parent=1 // pred_check_branch
      %455 = sbr.rel (0) target = $region53
    $region52: #{tpu_custom_call.1} parent=1 // pred_region
      %456 = dma.done [#allocation4], 256
    $region53: #{tpu_custom_call.1} parent=1 // pred_fallthru
      _
    %457 = vsyncpa [#allocation3], 1
    %458 = vsyncpa [#allocation6], 1
    %459 = vsyncpa [#allocation9], 1
    %460 = vsyncpa [#allocation4], 1

</llo_original>
